<compile_context>
chip_gen: v7x
topology: tpu7x:2x2x1
jax: 0.10.0
libtpu: 0.0.40
codegen_flags: <defaults>
</compile_context>

<pallas_src>
import math
import functools

import jax
import jax.numpy as jnp
from jax.experimental import pallas as pl
from jax.experimental.pallas import tpu as pltpu

LANE = 128
SUBLANE = 8


def _round_up(n, m):
    return ((n + m - 1) // m) * m


def qnet_kernel(x_ref,
                w1_ref, b1_ref,
                w2_ref, b2_ref,
                w3_ref, b3_ref,
                w4_ref, b4_ref,
                out_ref):
    """Fused 4-layer MLP forward for one batch tile (weights VMEM-resident)."""
    x = x_ref[...]  # already bf16 (cast once in the wrapper)

    h1 = jnp.dot(x, w1_ref[...], preferred_element_type=jnp.float32) + b1_ref[...]
    h1 = jnp.maximum(h1, 0.0).astype(jnp.bfloat16)

    h2 = jnp.dot(h1, w2_ref[...], preferred_element_type=jnp.float32) + b2_ref[...]
    h2 = jnp.maximum(h2, 0.0).astype(jnp.bfloat16)

    h3 = jnp.dot(h2, w3_ref[...], preferred_element_type=jnp.float32) + b3_ref[...]
    h3 = jnp.maximum(h3, 0.0).astype(jnp.bfloat16)

    h4 = jnp.dot(h3, w4_ref[...], preferred_element_type=jnp.float32) + b4_ref[...]
    out_ref[...] = h4.astype(out_ref.dtype)


@functools.partial(jax.jit, static_argnames=("batch_tile",))
def qnetwork_forward(x, params, *, batch_tile=256):
    """x: [B, state_size] float32. params: dict name -> (w [in,out] f32, b [1,out] f32)."""
    B, S = x.shape
    w1, b1 = params["fc1"]
    w2, b2 = params["fc2"]
    w3, b3 = params["fc3"]
    w4, b4 = params["fc4"]
    A = w4.shape[1]

    # Pad hidden / output feature dims to lane multiples (exact semantics,
    # see header).  Input state dim stays as-is (full-array block is legal).
    H1 = _round_up(w1.shape[1], LANE)
    H2 = _round_up(w2.shape[1], LANE)
    H3 = _round_up(w3.shape[1], LANE)
    A_pad = _round_up(A, LANE)

    def pad_wb(w, b, out_dim, in_dim=None):
        in_pad = 0 if in_dim is None else in_dim - w.shape[0]
        wp = jnp.pad(w, ((0, in_pad), (0, out_dim - w.shape[1])))
        bp = jnp.pad(b, ((0, 0), (0, out_dim - b.shape[1])))
        return wp.astype(jnp.bfloat16), bp  # bf16 matmul operand, f32 bias

    w1b, b1p = pad_wb(w1, b1, H1)
    w2b, b2p = pad_wb(w2, b2, H2, in_dim=H1)
    w3b, b3p = pad_wb(w3, b3, H3, in_dim=H2)
    w4b, b4p = pad_wb(w4, b4, A_pad, in_dim=H3)

    # Ragged / small batches: shrink the tile to the batch, zero-pad the rest.
    tile = _round_up(min(batch_tile, _round_up(B, SUBLANE)), SUBLANE)
    Bp = _round_up(B, tile)

    # Cast the (only gridded) activation stream to bf16 once -> half the
    # HBM->VMEM bytes per batch tile.
    xb = x.astype(jnp.bfloat16)
    if Bp != B:
        xb = jnp.pad(xb, ((0, Bp - B), (0, 0)))
    grid = (Bp // tile,)

    # Whole-array, VMEM-resident operands (no per-grid-step DMA).
    resident = pl.BlockSpec(memory_space=pltpu.MemorySpace.VMEM)

    out = pl.pallas_call(
        qnet_kernel,
        out_shape=jax.ShapeDtypeStruct((Bp, A_pad), jnp.float32),
        grid_spec=pltpu.PrefetchScalarGridSpec(
            num_scalar_prefetch=0,
            grid=grid,
            in_specs=[
                pl.BlockSpec((tile, S), lambda i: (i, 0)),  # x batch tile
                resident, resident,                         # w1, b1
                resident, resident,                         # w2, b2
                resident, resident,                         # w3, b3
                resident, resident,                         # w4, b4
            ],
            out_specs=pl.BlockSpec((tile, A_pad), lambda i: (i, 0)),
        ),
        compiler_params=pltpu.CompilerParams(
            dimension_semantics=("parallel",)),
    )(xb, w1b, b1p, w2b, b2p, w3b, b3p, w4b, b4p)

    return out[:B, :A]


def init_params(key, state_size, action_size,
                fc1_units=128, fc2_units=64, fc3_units=32):
    """Deterministic init mimicking nn.Linear's default U(-1/sqrt(fan_in), +)."""
    dims = [(state_size, fc1_units), (fc1_units, fc2_units),
            (fc2_units, fc3_units), (fc3_units, action_size)]
    names = ["fc1", "fc2", "fc3", "fc4"]
    params = {}
    for name, (fan_in, fan_out) in zip(names, dims):
        key, kw, kb = jax.random.split(key, 3)
        bound = 1.0 / math.sqrt(fan_in)
        w = jax.random.uniform(kw, (fan_in, fan_out), jnp.float32, -bound, bound)
        b = jax.random.uniform(kb, (1, fan_out), jnp.float32, -bound, bound)
        params[name] = (w, b)
    return params


def reference_forward(x, params):
    """Mirrors the kernel's numerics: bf16 operands, f32 accumulation, f32 bias/ReLU."""
    h = x.astype(jnp.bfloat16)
    for name in ("fc1", "fc2", "fc3"):
        w, b = params[name]
        h = jnp.dot(h, w.astype(jnp.bfloat16), preferred_element_type=jnp.float32) + b
        h = jnp.maximum(h, 0.0).astype(jnp.bfloat16)
    w, b = params["fc4"]
    return jnp.dot(h, w.astype(jnp.bfloat16), preferred_element_type=jnp.float32) + b


if __name__ == "__main__":
    key = jax.random.PRNGKey(0)
    state_size, action_size = 8, 4
    batch = 16

    k_x, k_p = jax.random.split(key)
    x = jax.random.normal(k_x, (batch, state_size), jnp.float32)
    params = init_params(k_p, state_size, action_size)

    out = qnetwork_forward(x, params)
    out = jax.block_until_ready(out)

    ref = reference_forward(x, params)
    assert out.shape == (batch, action_size), out.shape
    # bf16-operand / f32-accumulate reference -> tolerance looser than pure f32.
    assert jnp.allclose(out, ref, atol=1e-2, rtol=1e-2), "mismatch vs reference"

    print("KERNEL_OK")
</pallas_src>

<mosaic_0001>
module attributes {stable_mosaic.version = 11 : i64} {
  func.func @qnet_kernel(%arg0: i32, %arg1: memref<16x8xbf16, #tpu.memory_space<vmem>>, %arg2: memref<8x128xbf16, #tpu.memory_space<vmem>>, %arg3: memref<1x128xf32, #tpu.memory_space<vmem>>, %arg4: memref<128x128xbf16, #tpu.memory_space<vmem>>, %arg5: memref<1x128xf32, #tpu.memory_space<vmem>>, %arg6: memref<128x128xbf16, #tpu.memory_space<vmem>>, %arg7: memref<1x128xf32, #tpu.memory_space<vmem>>, %arg8: memref<128x128xbf16, #tpu.memory_space<vmem>>, %arg9: memref<1x128xf32, #tpu.memory_space<vmem>>, %arg10: memref<16x128xf32, #tpu.memory_space<vmem>>) attributes {dimension_semantics = [#tpu.dimension_semantics<parallel>], iteration_bounds = array<i64: 1>, scalar_prefetch = 0 : i64, scratch_operands = 0 : i64, tpu.core_type = #tpu.core_type<tc>, window_params = [{transform_indices = @transform_0, window_bounds = array<i64: 16, 8>}, {pipeline_mode = #tpu.pipeline_mode<synchronous>, transform_indices = @transform_1, window_bounds = array<i64: 8, 128>}, {pipeline_mode = #tpu.pipeline_mode<synchronous>, transform_indices = @transform_2, window_bounds = array<i64: 1, 128>}, {pipeline_mode = #tpu.pipeline_mode<synchronous>, transform_indices = @transform_3, window_bounds = array<i64: 128, 128>}, {pipeline_mode = #tpu.pipeline_mode<synchronous>, transform_indices = @transform_4, window_bounds = array<i64: 1, 128>}, {pipeline_mode = #tpu.pipeline_mode<synchronous>, transform_indices = @transform_5, window_bounds = array<i64: 128, 128>}, {pipeline_mode = #tpu.pipeline_mode<synchronous>, transform_indices = @transform_6, window_bounds = array<i64: 1, 128>}, {pipeline_mode = #tpu.pipeline_mode<synchronous>, transform_indices = @transform_7, window_bounds = array<i64: 128, 128>}, {pipeline_mode = #tpu.pipeline_mode<synchronous>, transform_indices = @transform_8, window_bounds = array<i64: 1, 128>}, {transform_indices = @transform_9, window_bounds = array<i64: 16, 128>}]} {
    %c0 = arith.constant 0 : index
    %c0_0 = arith.constant 0 : index
    %0 = vector.load %arg1[%c0, %c0_0] : memref<16x8xbf16, #tpu.memory_space<vmem>>, vector<16x8xbf16>
    %c0_1 = arith.constant 0 : index
    %c0_2 = arith.constant 0 : index
    %1 = vector.load %arg2[%c0_1, %c0_2] : memref<8x128xbf16, #tpu.memory_space<vmem>>, vector<8x128xbf16>
    %cst = arith.constant dense<0.000000e+00> : vector<16x128xf32>
    %2 = tpu.matmul %0, %1, %cst {dimension_numbers = #tpu.dot_dimension_numbers<[1], [0], [0], [1], [0, 0, 1, 1], [], []>} : vector<16x8xbf16>, vector<8x128xbf16>, vector<16x128xf32> -> vector<16x128xf32>
    %c0_3 = arith.constant 0 : index
    %c0_4 = arith.constant 0 : index
    %3 = vector.load %arg3[%c0_3, %c0_4] : memref<1x128xf32, #tpu.memory_space<vmem>>, vector<1x128xf32>
    %4 = vector.broadcast %3 : vector<1x128xf32> to vector<16x128xf32>
    %5 = arith.addf %2, %4 : vector<16x128xf32>
    %cst_5 = arith.constant 0.000000e+00 : f32
    %6 = vector.broadcast %cst_5 : f32 to vector<16x128xf32>
    %7 = arith.maximumf %5, %6 : vector<16x128xf32>
    %8 = arith.truncf %7 : vector<16x128xf32> to vector<16x128xbf16>
    %c0_6 = arith.constant 0 : index
    %c0_7 = arith.constant 0 : index
    %9 = vector.load %arg4[%c0_6, %c0_7] : memref<128x128xbf16, #tpu.memory_space<vmem>>, vector<128x128xbf16>
    %cst_8 = arith.constant dense<0.000000e+00> : vector<16x128xf32>
    %10 = tpu.matmul %8, %9, %cst_8 {dimension_numbers = #tpu.dot_dimension_numbers<[1], [0], [0], [1], [0, 0, 1, 1], [], []>} : vector<16x128xbf16>, vector<128x128xbf16>, vector<16x128xf32> -> vector<16x128xf32>
    %c0_9 = arith.constant 0 : index
    %c0_10 = arith.constant 0 : index
    %11 = vector.load %arg5[%c0_9, %c0_10] : memref<1x128xf32, #tpu.memory_space<vmem>>, vector<1x128xf32>
    %12 = vector.broadcast %11 : vector<1x128xf32> to vector<16x128xf32>
    %13 = arith.addf %10, %12 : vector<16x128xf32>
    %cst_11 = arith.constant 0.000000e+00 : f32
    %14 = vector.broadcast %cst_11 : f32 to vector<16x128xf32>
    %15 = arith.maximumf %13, %14 : vector<16x128xf32>
    %16 = arith.truncf %15 : vector<16x128xf32> to vector<16x128xbf16>
    %c0_12 = arith.constant 0 : index
    %c0_13 = arith.constant 0 : index
    %17 = vector.load %arg6[%c0_12, %c0_13] : memref<128x128xbf16, #tpu.memory_space<vmem>>, vector<128x128xbf16>
    %cst_14 = arith.constant dense<0.000000e+00> : vector<16x128xf32>
    %18 = tpu.matmul %16, %17, %cst_14 {dimension_numbers = #tpu.dot_dimension_numbers<[1], [0], [0], [1], [0, 0, 1, 1], [], []>} : vector<16x128xbf16>, vector<128x128xbf16>, vector<16x128xf32> -> vector<16x128xf32>
    %c0_15 = arith.constant 0 : index
    %c0_16 = arith.constant 0 : index
    %19 = vector.load %arg7[%c0_15, %c0_16] : memref<1x128xf32, #tpu.memory_space<vmem>>, vector<1x128xf32>
    %20 = vector.broadcast %19 : vector<1x128xf32> to vector<16x128xf32>
    %21 = arith.addf %18, %20 : vector<16x128xf32>
    %cst_17 = arith.constant 0.000000e+00 : f32
    %22 = vector.broadcast %cst_17 : f32 to vector<16x128xf32>
    %23 = arith.maximumf %21, %22 : vector<16x128xf32>
    %24 = arith.truncf %23 : vector<16x128xf32> to vector<16x128xbf16>
    %c0_18 = arith.constant 0 : index
    %c0_19 = arith.constant 0 : index
    %25 = vector.load %arg8[%c0_18, %c0_19] : memref<128x128xbf16, #tpu.memory_space<vmem>>, vector<128x128xbf16>
    %cst_20 = arith.constant dense<0.000000e+00> : vector<16x128xf32>
    %26 = tpu.matmul %24, %25, %cst_20 {dimension_numbers = #tpu.dot_dimension_numbers<[1], [0], [0], [1], [0, 0, 1, 1], [], []>} : vector<16x128xbf16>, vector<128x128xbf16>, vector<16x128xf32> -> vector<16x128xf32>
    %c0_21 = arith.constant 0 : index
    %c0_22 = arith.constant 0 : index
    %27 = vector.load %arg9[%c0_21, %c0_22] : memref<1x128xf32, #tpu.memory_space<vmem>>, vector<1x128xf32>
    %28 = vector.broadcast %27 : vector<1x128xf32> to vector<16x128xf32>
    %29 = arith.addf %26, %28 : vector<16x128xf32>
    %c0_23 = arith.constant 0 : index
    %c0_24 = arith.constant 0 : index
    %30 = vector.load %arg10[%c0_23, %c0_24] : memref<16x128xf32, #tpu.memory_space<vmem>>, vector<16x128xf32>
    tpu.vector_store %arg10[%c0_23, %c0_24], %29 {strides = array<i32>} : memref<16x128xf32, #tpu.memory_space<vmem>>, vector<16x128xf32>,
    return
  }
  func.func @transform_0(%arg0: i32) -> (i32, i32) {
    %c0_i32 = arith.constant 0 : i32
    %c0_i32_0 = arith.constant 0 : i32
    return %arg0, %c0_i32 : i32, i32
  }
  func.func @transform_1(%arg0: i32) -> (i32, i32) {
    %c0_i32 = arith.constant 0 : i32
    %c0_i32_0 = arith.constant 0 : i32
    %c0_i32_1 = arith.constant 0 : i32
    return %c0_i32, %c0_i32_0 : i32, i32
  }
  func.func @transform_2(%arg0: i32) -> (i32, i32) {
    %c0_i32 = arith.constant 0 : i32
    %c0_i32_0 = arith.constant 0 : i32
    %c0_i32_1 = arith.constant 0 : i32
    return %c0_i32, %c0_i32_0 : i32, i32
  }
  func.func @transform_3(%arg0: i32) -> (i32, i32) {
    %c0_i32 = arith.constant 0 : i32
    %c0_i32_0 = arith.constant 0 : i32
    %c0_i32_1 = arith.constant 0 : i32
    return %c0_i32, %c0_i32_0 : i32, i32
  }
  func.func @transform_4(%arg0: i32) -> (i32, i32) {
    %c0_i32 = arith.constant 0 : i32
    %c0_i32_0 = arith.constant 0 : i32
    %c0_i32_1 = arith.constant 0 : i32
    return %c0_i32, %c0_i32_0 : i32, i32
  }
  func.func @transform_5(%arg0: i32) -> (i32, i32) {
    %c0_i32 = arith.constant 0 : i32
    %c0_i32_0 = arith.constant 0 : i32
    %c0_i32_1 = arith.constant 0 : i32
    return %c0_i32, %c0_i32_0 : i32, i32
  }
  func.func @transform_6(%arg0: i32) -> (i32, i32) {
    %c0_i32 = arith.constant 0 : i32
    %c0_i32_0 = arith.constant 0 : i32
    %c0_i32_1 = arith.constant 0 : i32
    return %c0_i32, %c0_i32_0 : i32, i32
  }
  func.func @transform_7(%arg0: i32) -> (i32, i32) {
    %c0_i32 = arith.constant 0 : i32
    %c0_i32_0 = arith.constant 0 : i32
    %c0_i32_1 = arith.constant 0 : i32
    return %c0_i32, %c0_i32_0 : i32, i32
  }
  func.func @transform_8(%arg0: i32) -> (i32, i32) {
    %c0_i32 = arith.constant 0 : i32
    %c0_i32_0 = arith.constant 0 : i32
    %c0_i32_1 = arith.constant 0 : i32
    return %c0_i32, %c0_i32_0 : i32, i32
  }
  func.func @transform_9(%arg0: i32) -> (i32, i32) {
    %c0_i32 = arith.constant 0 : i32
    %c0_i32_0 = arith.constant 0 : i32
    return %arg0, %c0_i32 : i32, i32
  }
}

</mosaic_0001>

<llo_original>
// kernel: qnetwork_forward.1
$region0: #{qnetwork_forward.1}
  #allocation0 [shape = 'u32[]', space=smem, size = 0x4, offset = 0x4, fixed_abs, tag = 'smem constant byte address 0x4 - core index']
  #allocation1 [shape = 'u32[144,128]{1,0:T(1,128)}', space=vmem, size = 0x12000, scoped, tag = 'internal scratch']
  %s0 = inlined_call_operand.vmem [shape: bf16[16,8], index: 0, kind: input, shape index: {}]
  %s1 = inlined_call_operand.vmem [shape: bf16[8,128], index: 1, kind: input, shape index: {}]
  %s2 = inlined_call_operand.vmem [shape: f32[1,128], index: 2, kind: input, shape index: {}]
  %s3 = inlined_call_operand.vmem [shape: bf16[128,128], index: 3, kind: input, shape index: {}]
  %s4 = inlined_call_operand.vmem [shape: f32[1,128], index: 4, kind: input, shape index: {}]
  %s5 = inlined_call_operand.vmem [shape: bf16[128,128], index: 5, kind: input, shape index: {}]
  %s6 = inlined_call_operand.vmem [shape: f32[1,128], index: 6, kind: input, shape index: {}]
  %s7 = inlined_call_operand.vmem [shape: bf16[128,128], index: 7, kind: input, shape index: {}]
  %s8 = inlined_call_operand.vmem [shape: f32[1,128], index: 8, kind: input, shape index: {}]
  %s9 = inlined_call_operand.vmem [shape: f32[16,128], index: 9, kind: output, shape index: {}]
  %s10 = sld [smem:[#allocation0]]
  $region46: #{qnetwork_forward.1} parent=0
    _
  %s12 = ssub.s32 1, %s10
  %s13 = scalar_select 0, %s12, %s10
  // Predicated region
  $region2: #{qnetwork_forward.1} parent=0 // pred_check
    _
  $region3: #{qnetwork_forward.1} parent=0 // pred_check_branch
    %15 = sbr.rel (0) target = $region5
  $region4: #{qnetwork_forward.1} parent=0 // pred_region
    _
  $region5: #{qnetwork_forward.1} parent=0 // pred_fallthru
    _
  // Predicated region
  $region6: #{qnetwork_forward.1} parent=0 // pred_check
    _
  $region7: #{qnetwork_forward.1} parent=0 // pred_check_branch
    %17 = sbr.rel (0) target = $region9
  $region8: #{qnetwork_forward.1} parent=0 // pred_region
    _
  $region9: #{qnetwork_forward.1} parent=0 // pred_fallthru
    _
  // Predicated region
  $region10: #{qnetwork_forward.1} parent=0 // pred_check
    _
  $region11: #{qnetwork_forward.1} parent=0 // pred_check_branch
    %19 = sbr.rel (0) target = $region13
  $region12: #{qnetwork_forward.1} parent=0 // pred_region
    _
  $region13: #{qnetwork_forward.1} parent=0 // pred_fallthru
    _
  // Predicated region
  $region14: #{qnetwork_forward.1} parent=0 // pred_check
    _
  $region15: #{qnetwork_forward.1} parent=0 // pred_check_branch
    %21 = sbr.rel (0) target = $region17
  $region16: #{qnetwork_forward.1} parent=0 // pred_region
    _
  $region17: #{qnetwork_forward.1} parent=0 // pred_fallthru
    _
  // Predicated region
  $region18: #{qnetwork_forward.1} parent=0 // pred_check
    _
  $region19: #{qnetwork_forward.1} parent=0 // pred_check_branch
    %23 = sbr.rel (0) target = $region21
  $region20: #{qnetwork_forward.1} parent=0 // pred_region
    _
  $region21: #{qnetwork_forward.1} parent=0 // pred_fallthru
    _
  // Predicated region
  $region22: #{qnetwork_forward.1} parent=0 // pred_check
    _
  $region23: #{qnetwork_forward.1} parent=0 // pred_check_branch
    %25 = sbr.rel (0) target = $region25
  $region24: #{qnetwork_forward.1} parent=0 // pred_region
    _
  $region25: #{qnetwork_forward.1} parent=0 // pred_fallthru
    _
  // Predicated region
  $region26: #{qnetwork_forward.1} parent=0 // pred_check
    _
  $region27: #{qnetwork_forward.1} parent=0 // pred_check_branch
    %27 = sbr.rel (0) target = $region29
  $region28: #{qnetwork_forward.1} parent=0 // pred_region
    _
  $region29: #{qnetwork_forward.1} parent=0 // pred_fallthru
    _
  // Predicated region
  $region30: #{qnetwork_forward.1} parent=0 // pred_check
    _
  $region31: #{qnetwork_forward.1} parent=0 // pred_check_branch
    %29 = sbr.rel (0) target = $region33
  $region32: #{qnetwork_forward.1} parent=0 // pred_region
    _
  $region33: #{qnetwork_forward.1} parent=0 // pred_fallthru
    _
  // Predicated region
  $region34: #{qnetwork_forward.1} parent=0 // pred_check
    _
  $region35: #{qnetwork_forward.1} parent=0 // pred_check_branch
    %31 = sbr.rel (0) target = $region37
  $region36: #{qnetwork_forward.1} parent=0 // pred_region
    _
  $region37: #{qnetwork_forward.1} parent=0 // pred_fallthru
    _
  %v33 = vld [vmem:[%s0] sm:$0xf]
  %v34 = vld [vmem:[%s0 + $0x4] sm:$0xf]
  %v35 = vld [vmem:[%s1] sm:$0xf]
  %v36 = vld [vmem:[%s2] sm:$0x1]
  %v38 = vlaneseq
  %v39 = vshrl.u32 %v38, 7
  %v40 = vsub.s32 0, %v39
  %v41 = vrot.slane %v36, %v40
  %v45 = vunpack.c.l.b16 %v33
  %v46 = vunpack.c.l.b16 %v34
  %v47 = vpack.c.b16 %v46, %v45
  %vm48 = vcmask 64512
  %v50 = vsel %vm48, %v47, 0
  %vm52 = vcmask 1043456
  %v54 = vsel %vm52, %v35, 0
  %56 = vmatprep.subr.bf16.mxu0 0
  %57 = vmatpush1.bf16.msra.mxu0 %v54
  %58 = vmatprep.subr.bf16.mxu0 0
  %59 = vmatpush1.bf16.msra.mxu0 0
  %60 = vmatprep.subr.bf16.mxu0 0
  %61 = vmatpush1.bf16.msra.mxu0 0
  %62 = vmatprep.subr.bf16.mxu0 0
  %63 = vmatpush1.bf16.msra.mxu0 0
  %64 = vmatprep.subr.bf16.mxu0 0
  %65 = vmatpush1.bf16.msra.mxu0 0
  %66 = vmatprep.subr.bf16.mxu0 0
  %67 = vmatpush1.bf16.msra.mxu0 0
  %68 = vmatprep.subr.bf16.mxu0 0
  %69 = vmatpush1.bf16.msra.mxu0 0
  %70 = vmatprep.subr.bf16.mxu0 0
  %71 = vmatpush1.bf16.msra.mxu0 0
  %72 = vmatprep.subr.bf16.mxu0 0
  %73 = vmatpush1.bf16.msra.mxu0 0
  %74 = vmatprep.subr.bf16.mxu0 0
  %75 = vmatpush1.bf16.msra.mxu0 0
  %76 = vmatprep.subr.bf16.mxu0 0
  %77 = vmatpush1.bf16.msra.mxu0 0
  %78 = vmatprep.subr.bf16.mxu0 0
  %79 = vmatpush1.bf16.msra.mxu0 0
  %80 = vmatprep.subr.bf16.mxu0 0
  %81 = vmatpush1.bf16.msra.mxu0 0
  %82 = vmatprep.subr.bf16.mxu0 0
  %83 = vmatpush1.bf16.msra.mxu0 0
  %84 = vmatprep.subr.bf16.mxu0 0
  %85 = vmatpush1.bf16.msra.mxu0 0
  %86 = vmatprep.subr.bf16.mxu0 0
  %87 = vmatpush1.bf16.msra.mxu0 0
  %88 = vmatprep.mubr.bf16.mxu0 0
  %89 = vmatmul.mubr.bf16.gmra.mrb[0].mxu0 %v50
  %v90 = vpop.f32.mrb[0].mxu0
  %v91 = vadd.f32 %v41, %v90
  %v92 = vpop.f32.mrb[0].mxu0
  %v93 = vpop.f32.mrb[0].mxu0
  %v94 = vadd.f32 %v41, %v93
  %v95 = vpop.f32.mrb[0].mxu0
  %96 = vdwg.mxu0
  %v97 = vmax.f32 %v91, 0.0
  %v98 = vmax.f32 %v94, 0.0
  %v99 = vpack.c.bf16 %v98, %v97
  %v100 = vld [vmem:[%s3] sm:$0xf]
  %v101 = vld [vmem:[%s3 + $0x4] sm:$0xf]
  %v102 = vld [vmem:[%s3 + $0x8] sm:$0xf]
  %v103 = vld [vmem:[%s3 + $0xc] sm:$0xf]
  %v104 = vld [vmem:[%s3 + $0x10] sm:$0xf]
  %v105 = vld [vmem:[%s3 + $0x14] sm:$0xf]
  %v106 = vld [vmem:[%s3 + $0x18] sm:$0xf]
  %v107 = vld [vmem:[%s3 + $0x1c] sm:$0xf]
  %v108 = vld [vmem:[%s3 + $0x20] sm:$0xf]
  %v109 = vld [vmem:[%s3 + $0x24] sm:$0xf]
  %v110 = vld [vmem:[%s3 + $0x28] sm:$0xf]
  %v111 = vld [vmem:[%s3 + $0x2c] sm:$0xf]
  %v112 = vld [vmem:[%s3 + $0x30] sm:$0xf]
  %v113 = vld [vmem:[%s3 + $0x34] sm:$0xf]
  %v114 = vld [vmem:[%s3 + $0x38] sm:$0xf]
  %v115 = vld [vmem:[%s3 + $0x3c] sm:$0xf]
  %v116 = vld [vmem:[%s4] sm:$0x1]
  %v118 = vlaneseq
  %v119 = vshrl.u32 %v118, 7
  %v120 = vsub.s32 0, %v119
  %v121 = vrot.slane %v116, %v120
  %v139 = vunpack.c.l.b16 %v100
  %v140 = vunpack.c.l.b16 %v101
  %v141 = vunpack.c.l.b16 %v102
  %v142 = vunpack.c.l.b16 %v103
  %v143 = vunpack.c.l.b16 %v104
  %v144 = vunpack.c.l.b16 %v105
  %v145 = vunpack.c.l.b16 %v106
  %v146 = vunpack.c.l.b16 %v107
  %v147 = vunpack.c.l.b16 %v108
  %v148 = vunpack.c.l.b16 %v109
  %v149 = vunpack.c.l.b16 %v110
  %v150 = vunpack.c.l.b16 %v111
  %v151 = vunpack.c.l.b16 %v112
  %v152 = vunpack.c.l.b16 %v113
  %v153 = vunpack.c.l.b16 %v114
  %v154 = vunpack.c.l.b16 %v115
  %v155 = vpack.c.b16 %v140, %v139
  %v156 = vpack.c.b16 %v142, %v141
  %v157 = vpack.c.b16 %v144, %v143
  %v158 = vpack.c.b16 %v146, %v145
  %v159 = vpack.c.b16 %v148, %v147
  %v160 = vpack.c.b16 %v150, %v149
  %v161 = vpack.c.b16 %v152, %v151
  %v162 = vpack.c.b16 %v154, %v153
  %171 = vmatprep.subr.bf16.mxu0 0
  %172 = vmatpush1.bf16.msra.mxu0 %v155
  %173 = vmatprep.subr.bf16.mxu0 0
  %174 = vmatpush1.bf16.msra.mxu0 %v156
  %175 = vmatprep.subr.bf16.mxu0 0
  %176 = vmatpush1.bf16.msra.mxu0 %v157
  %177 = vmatprep.subr.bf16.mxu0 0
  %178 = vmatpush1.bf16.msra.mxu0 %v158
  %179 = vmatprep.subr.bf16.mxu0 0
  %180 = vmatpush1.bf16.msra.mxu0 %v159
  %181 = vmatprep.subr.bf16.mxu0 0
  %182 = vmatpush1.bf16.msra.mxu0 %v160
  %183 = vmatprep.subr.bf16.mxu0 0
  %184 = vmatpush1.bf16.msra.mxu0 %v161
  %185 = vmatprep.subr.bf16.mxu0 0
  %186 = vmatpush1.bf16.msra.mxu0 %v162
  %187 = vmatprep.subr.bf16.mxu0 0
  %188 = vmatpush1.bf16.msra.mxu0 0
  %189 = vmatprep.subr.bf16.mxu0 0
  %190 = vmatpush1.bf16.msra.mxu0 0
  %191 = vmatprep.subr.bf16.mxu0 0
  %192 = vmatpush1.bf16.msra.mxu0 0
  %193 = vmatprep.subr.bf16.mxu0 0
  %194 = vmatpush1.bf16.msra.mxu0 0
  %195 = vmatprep.subr.bf16.mxu0 0
  %196 = vmatpush1.bf16.msra.mxu0 0
  %197 = vmatprep.subr.bf16.mxu0 0
  %198 = vmatpush1.bf16.msra.mxu0 0
  %199 = vmatprep.subr.bf16.mxu0 0
  %200 = vmatpush1.bf16.msra.mxu0 0
  %201 = vmatprep.subr.bf16.mxu0 0
  %202 = vmatpush1.bf16.msra.mxu0 0
  %203 = vmatprep.mubr.bf16.mxu0 0
  %204 = vmatmul.mubr.bf16.gmra.mrb[0].mxu0 %v99
  %v205 = vpop.f32.mrb[0].mxu0
  %v206 = vadd.f32 %v121, %v205
  %v207 = vpop.f32.mrb[0].mxu0
  %v208 = vpop.f32.mrb[0].mxu0
  %v209 = vadd.f32 %v121, %v208
  %v210 = vpop.f32.mrb[0].mxu0
  %211 = vdwg.mxu0
  %v212 = vmax.f32 %v206, 0.0
  %v213 = vmax.f32 %v209, 0.0
  %v214 = vpack.c.bf16 %v213, %v212
  %v215 = vld [vmem:[%s5] sm:$0xf]
  %v216 = vld [vmem:[%s5 + $0x4] sm:$0xf]
  %v217 = vld [vmem:[%s5 + $0x8] sm:$0xf]
  %v218 = vld [vmem:[%s5 + $0xc] sm:$0xf]
  %v219 = vld [vmem:[%s5 + $0x10] sm:$0xf]
  %v220 = vld [vmem:[%s5 + $0x14] sm:$0xf]
  %v221 = vld [vmem:[%s5 + $0x18] sm:$0xf]
  %v222 = vld [vmem:[%s5 + $0x1c] sm:$0xf]
  %v223 = vld [vmem:[%s5 + $0x20] sm:$0xf]
  %v224 = vld [vmem:[%s5 + $0x24] sm:$0xf]
  %v225 = vld [vmem:[%s5 + $0x28] sm:$0xf]
  %v226 = vld [vmem:[%s5 + $0x2c] sm:$0xf]
  %v227 = vld [vmem:[%s5 + $0x30] sm:$0xf]
  %v228 = vld [vmem:[%s5 + $0x34] sm:$0xf]
  %v229 = vld [vmem:[%s5 + $0x38] sm:$0xf]
  %v230 = vld [vmem:[%s5 + $0x3c] sm:$0xf]
  %v231 = vld [vmem:[%s6] sm:$0x1]
  %v233 = vlaneseq
  %v234 = vshrl.u32 %v233, 7
  %v235 = vsub.s32 0, %v234
  %v236 = vrot.slane %v231, %v235
  %v254 = vunpack.c.l.b16 %v215
  %v255 = vunpack.c.l.b16 %v216
  %v256 = vunpack.c.l.b16 %v217
  %v257 = vunpack.c.l.b16 %v218
  %v258 = vunpack.c.l.b16 %v219
  %v259 = vunpack.c.l.b16 %v220
  %v260 = vunpack.c.l.b16 %v221
  %v261 = vunpack.c.l.b16 %v222
  %v262 = vunpack.c.l.b16 %v223
  %v263 = vunpack.c.l.b16 %v224
  %v264 = vunpack.c.l.b16 %v225
  %v265 = vunpack.c.l.b16 %v226
  %v266 = vunpack.c.l.b16 %v227
  %v267 = vunpack.c.l.b16 %v228
  %v268 = vunpack.c.l.b16 %v229
  %v269 = vunpack.c.l.b16 %v230
  %v270 = vpack.c.b16 %v255, %v254
  %v271 = vpack.c.b16 %v257, %v256
  %v272 = vpack.c.b16 %v259, %v258
  %v273 = vpack.c.b16 %v261, %v260
  %v274 = vpack.c.b16 %v263, %v262
  %v275 = vpack.c.b16 %v265, %v264
  %v276 = vpack.c.b16 %v267, %v266
  %v277 = vpack.c.b16 %v269, %v268
  %286 = vmatprep.subr.bf16.mxu0 0
  %287 = vmatpush1.bf16.msra.mxu0 %v270
  %288 = vmatprep.subr.bf16.mxu0 0
  %289 = vmatpush1.bf16.msra.mxu0 %v271
  %290 = vmatprep.subr.bf16.mxu0 0
  %291 = vmatpush1.bf16.msra.mxu0 %v272
  %292 = vmatprep.subr.bf16.mxu0 0
  %293 = vmatpush1.bf16.msra.mxu0 %v273
  %294 = vmatprep.subr.bf16.mxu0 0
  %295 = vmatpush1.bf16.msra.mxu0 %v274
  %296 = vmatprep.subr.bf16.mxu0 0
  %297 = vmatpush1.bf16.msra.mxu0 %v275
  %298 = vmatprep.subr.bf16.mxu0 0
  %299 = vmatpush1.bf16.msra.mxu0 %v276
  %300 = vmatprep.subr.bf16.mxu0 0
  %301 = vmatpush1.bf16.msra.mxu0 %v277
  %302 = vmatprep.subr.bf16.mxu0 0
  %303 = vmatpush1.bf16.msra.mxu0 0
  %304 = vmatprep.subr.bf16.mxu0 0
  %305 = vmatpush1.bf16.msra.mxu0 0
  %306 = vmatprep.subr.bf16.mxu0 0
  %307 = vmatpush1.bf16.msra.mxu0 0
  %308 = vmatprep.subr.bf16.mxu0 0
  %309 = vmatpush1.bf16.msra.mxu0 0
  %310 = vmatprep.subr.bf16.mxu0 0
  %311 = vmatpush1.bf16.msra.mxu0 0
  %312 = vmatprep.subr.bf16.mxu0 0
  %313 = vmatpush1.bf16.msra.mxu0 0
  %314 = vmatprep.subr.bf16.mxu0 0
  %315 = vmatpush1.bf16.msra.mxu0 0
  %316 = vmatprep.subr.bf16.mxu0 0
  %317 = vmatpush1.bf16.msra.mxu0 0
  %318 = vmatprep.mubr.bf16.mxu0 0
  %319 = vmatmul.mubr.bf16.gmra.mrb[0].mxu0 %v214
  %v320 = vpop.f32.mrb[0].mxu0
  %v321 = vadd.f32 %v236, %v320
  %v322 = vpop.f32.mrb[0].mxu0
  %v323 = vpop.f32.mrb[0].mxu0
  %v324 = vadd.f32 %v236, %v323
  %v325 = vpop.f32.mrb[0].mxu0
  %326 = vdwg.mxu0
  %v327 = vmax.f32 %v321, 0.0
  %v328 = vmax.f32 %v324, 0.0
  %v329 = vpack.c.bf16 %v328, %v327
  %v330 = vld [vmem:[%s7] sm:$0xf]
  %v331 = vld [vmem:[%s7 + $0x4] sm:$0xf]
  %v332 = vld [vmem:[%s7 + $0x8] sm:$0xf]
  %v333 = vld [vmem:[%s7 + $0xc] sm:$0xf]
  %v334 = vld [vmem:[%s7 + $0x10] sm:$0xf]
  %v335 = vld [vmem:[%s7 + $0x14] sm:$0xf]
  %v336 = vld [vmem:[%s7 + $0x18] sm:$0xf]
  %v337 = vld [vmem:[%s7 + $0x1c] sm:$0xf]
  %v338 = vld [vmem:[%s7 + $0x20] sm:$0xf]
  %v339 = vld [vmem:[%s7 + $0x24] sm:$0xf]
  %v340 = vld [vmem:[%s7 + $0x28] sm:$0xf]
  %v341 = vld [vmem:[%s7 + $0x2c] sm:$0xf]
  %v342 = vld [vmem:[%s7 + $0x30] sm:$0xf]
  %v343 = vld [vmem:[%s7 + $0x34] sm:$0xf]
  %v344 = vld [vmem:[%s7 + $0x38] sm:$0xf]
  %v345 = vld [vmem:[%s7 + $0x3c] sm:$0xf]
  %v346 = vld [vmem:[%s8] sm:$0x1]
  %v348 = vlaneseq
  %v349 = vshrl.u32 %v348, 7
  %v350 = vsub.s32 0, %v349
  %v351 = vrot.slane %v346, %v350
  %v369 = vunpack.c.l.b16 %v330
  %v370 = vunpack.c.l.b16 %v331
  %v371 = vunpack.c.l.b16 %v332
  %v372 = vunpack.c.l.b16 %v333
  %v373 = vunpack.c.l.b16 %v334
  %v374 = vunpack.c.l.b16 %v335
  %v375 = vunpack.c.l.b16 %v336
  %v376 = vunpack.c.l.b16 %v337
  %v377 = vunpack.c.l.b16 %v338
  %v378 = vunpack.c.l.b16 %v339
  %v379 = vunpack.c.l.b16 %v340
  %v380 = vunpack.c.l.b16 %v341
  %v381 = vunpack.c.l.b16 %v342
  %v382 = vunpack.c.l.b16 %v343
  %v383 = vunpack.c.l.b16 %v344
  %v384 = vunpack.c.l.b16 %v345
  %v385 = vpack.c.b16 %v370, %v369
  %v386 = vpack.c.b16 %v372, %v371
  %v387 = vpack.c.b16 %v374, %v373
  %v388 = vpack.c.b16 %v376, %v375
  %v389 = vpack.c.b16 %v378, %v377
  %v390 = vpack.c.b16 %v380, %v379
  %v391 = vpack.c.b16 %v382, %v381
  %v392 = vpack.c.b16 %v384, %v383
  %401 = vmatprep.subr.bf16.mxu0 0
  %402 = vmatpush1.bf16.msra.mxu0 %v385
  %403 = vmatprep.subr.bf16.mxu0 0
  %404 = vmatpush1.bf16.msra.mxu0 %v386
  %405 = vmatprep.subr.bf16.mxu0 0
  %406 = vmatpush1.bf16.msra.mxu0 %v387
  %407 = vmatprep.subr.bf16.mxu0 0
  %408 = vmatpush1.bf16.msra.mxu0 %v388
  %409 = vmatprep.subr.bf16.mxu0 0
  %410 = vmatpush1.bf16.msra.mxu0 %v389
  %411 = vmatprep.subr.bf16.mxu0 0
  %412 = vmatpush1.bf16.msra.mxu0 %v390
  %413 = vmatprep.subr.bf16.mxu0 0
  %414 = vmatpush1.bf16.msra.mxu0 %v391
  %415 = vmatprep.subr.bf16.mxu0 0
  %416 = vmatpush1.bf16.msra.mxu0 %v392
  %417 = vmatprep.subr.bf16.mxu0 0
  %418 = vmatpush1.bf16.msra.mxu0 0
  %419 = vmatprep.subr.bf16.mxu0 0
  %420 = vmatpush1.bf16.msra.mxu0 0
  %421 = vmatprep.subr.bf16.mxu0 0
  %422 = vmatpush1.bf16.msra.mxu0 0
  %423 = vmatprep.subr.bf16.mxu0 0
  %424 = vmatpush1.bf16.msra.mxu0 0
  %425 = vmatprep.subr.bf16.mxu0 0
  %426 = vmatpush1.bf16.msra.mxu0 0
  %427 = vmatprep.subr.bf16.mxu0 0
  %428 = vmatpush1.bf16.msra.mxu0 0
  %429 = vmatprep.subr.bf16.mxu0 0
  %430 = vmatpush1.bf16.msra.mxu0 0
  %431 = vmatprep.subr.bf16.mxu0 0
  %432 = vmatpush1.bf16.msra.mxu0 0
  %433 = vmatprep.mubr.bf16.mxu0 0
  %434 = vmatmul.mubr.bf16.gmra.mrb[0].mxu0 %v329
  %v435 = vpop.f32.mrb[0].mxu0
  %v436 = vadd.f32 %v351, %v435
  %v437 = vpop.f32.mrb[0].mxu0
  %v438 = vpop.f32.mrb[0].mxu0
  %v439 = vadd.f32 %v351, %v438
  %v440 = vpop.f32.mrb[0].mxu0
  %441 = vdwg.mxu0
  %442 = vst [vmem:[%s9] sm:$0xff] %v436
  %443 = vst [vmem:[%s9 + $0x8] sm:$0xff] %v439
  // Predicated region
  $region38: #{qnetwork_forward.1} parent=0 // pred_check
    _
  $region39: #{qnetwork_forward.1} parent=0 // pred_check_branch
    %445 = sbr.rel (0) target = $region41
  $region40: #{qnetwork_forward.1} parent=0 // pred_region
    _
  $region41: #{qnetwork_forward.1} parent=0 // pred_fallthru
    _
  // Predicated region
  $region42: #{qnetwork_forward.1} parent=0 // pred_check
    _
  $region43: #{qnetwork_forward.1} parent=0 // pred_check_branch
    %447 = sbr.rel (0) target = $region45
  $region44: #{qnetwork_forward.1} parent=0 // pred_region
    _
  $region45: #{qnetwork_forward.1} parent=0 // pred_fallthru
    _

</llo_original>
